<compile_context>
chip_gen: v6e
topology: v6e:2x2x1
jax: 0.10.0
libtpu: 0.0.40
codegen_flags: <defaults>
</compile_context>

<pallas_src>
import functools

import jax
import jax.numpy as jnp
import numpy as np
from jax import lax
from jax.experimental import pallas as pl
from jax.experimental.pallas import tpu as pltpu

LANE = 128   # TPU lane width: hidden feature dims padded to this
SUB = 8      # sublane rows used for the transposed output weight


def _round_up(n, m):
    return ((n + m - 1) // m) * m


def _const_map(i):          # weights/biases: same block every step -> resident
    return (0, 0)


def _x_map(i):              # batch-tile of the input
    return (i, 0)


def _out_map(i):            # lane-dense (1, tb) output row per batch tile
    return (0, i)


def _make_net_kernel(n_hidden: int, training: bool):
    """Fused forward over one (tb, D) batch tile."""

    def net_kernel(*refs):
        x_ref = refs[0]
        o_ref = refs[-1]
        p = refs[1:-1]                         # [w1,b1,...,w_h,b_h, wo_t, bo]

        h = x_ref[...].astype(jnp.bfloat16)    # (tb, D); cast in-kernel
        for li in range(n_hidden):
            w_ref = p[2 * li]
            b_ref = p[2 * li + 1]
            acc = jnp.dot(h, w_ref[...],
                          preferred_element_type=jnp.float32)      # MXU, f32 acc
            h = jnp.maximum(acc.astype(jnp.bfloat16) + b_ref[...], 0)  # bf16 VALU

        wo_ref, bo_ref = p[-2], p[-1]
        # Transposed final layer: contract the feature dim of both operands so
        # the result lands with batch on lanes -> (SUB, tb); only row 0 is real.
        yt = lax.dot_general(wo_ref[...], h, (((1,), (1,)), ((), ())),
                             preferred_element_type=jnp.float32)
        y = yt[0:1, :] + bo_ref[...]           # (1, tb) f32
        if not training:
            y = jax.nn.sigmoid(y)
        o_ref[...] = y.astype(o_ref.dtype)     # lane-dense (1, tb) store

    return net_kernel


def prepare_params(params):
    """One-time prep: zero-pad hidden widths to 128 lanes, cast to bf16, and
    store the output layer transposed as (SUB, in_pad).

    params = [(w1, b1), ..., (wo, bo)] with w of shape (in, out).
    Returns (flat, dims): flat = [w1,b1,...,w_h,b_h, wo_t, bo] and
    dims = tuple of real (fan_in, fan_out) per layer (for the cost hint).
    Zero padding + ReLU(0)=0 keeps the real outputs exact.
    """
    *hidden, (wo, bo) = params
    flat = []
    dims = []
    prev_pad = None
    for idx, (w, b) in enumerate(hidden):
        fan_in, fan_out = int(w.shape[0]), int(w.shape[1])
        in_pad = fan_in if idx == 0 else prev_pad
        out_pad = _round_up(fan_out, LANE)
        w_p = jnp.zeros((in_pad, out_pad), jnp.float32).at[:fan_in, :fan_out].set(w)
        b_p = jnp.zeros((1, out_pad), jnp.float32).at[0, :fan_out].set(b)
        flat.append(w_p.astype(jnp.bfloat16))
        flat.append(b_p.astype(jnp.bfloat16))
        dims.append((fan_in, fan_out))
        prev_pad = out_pad

    fan_in = int(wo.shape[0])
    in_pad = fan_in if not hidden else prev_pad
    wo_t = jnp.zeros((SUB, in_pad), jnp.float32).at[0, :fan_in].set(
        jnp.asarray(wo, jnp.float32)[:, 0])
    bo_p = jnp.asarray(bo, jnp.float32).reshape(1, 1)
    flat.append(wo_t.astype(jnp.bfloat16))
    flat.append(bo_p)
    dims.append((fan_in, 1))
    return flat, tuple(dims)


def _pick_batch_tiling(B, block_b):
    bmin = _round_up(B, LANE)                         # batch padded to 128
    tb = min(_round_up(block_b, LANE), bmin)
    b_pad = _round_up(bmin, tb)
    # Keep >= 2 grid steps so both v7x TensorCores get work when possible.
    if b_pad // tb < 2 and tb % (2 * LANE) == 0:
        tb //= 2
        b_pad = _round_up(bmin, tb)
    return tb, b_pad


def _net_forward(x, flat, *, dims, training=False, block_b=2048):
    """x: (B, D) f32, flat/dims from prepare_params. Returns (B, 1) f32."""
    B, D = x.shape
    n_hidden = (len(flat) - 2) // 2
    tb, b_pad = _pick_batch_tiling(B, block_b)
    grid = (b_pad // tb,)

    x_p = x
    if b_pad != B:
        x_p = jnp.zeros((b_pad, D), x.dtype).at[:B].set(x)

    in_specs = [pl.BlockSpec((tb, D), _x_map,
                             memory_space=pltpu.MemorySpace.VMEM)]
    for a in flat:
        in_specs.append(pl.BlockSpec(a.shape, _const_map,
                                     memory_space=pltpu.MemorySpace.VMEM))
    out_specs = pl.BlockSpec((1, tb), _out_map,
                             memory_space=pltpu.MemorySpace.VMEM)
    out_shape = jax.ShapeDtypeStruct((1, b_pad), jnp.float32)

    # Honest advisory cost hint: real (unpadded) FLOPs, shrunken output bytes.
    flops = int(2 * B * sum(fi * fo for fi, fo in dims))
    bytes_accessed = int(B * D * 4 + B * 4
                         + sum(int(a.size) * a.dtype.itemsize for a in flat))
    transcendentals = 0 if training else int(B)
    cost = pl.CostEstimate(flops=flops, transcendentals=transcendentals,
                           bytes_accessed=bytes_accessed)

    out = pl.pallas_call(
        _make_net_kernel(n_hidden, training),
        out_shape=out_shape,
        grid=grid,
        in_specs=in_specs,
        out_specs=out_specs,
        compiler_params=pltpu.CompilerParams(
            dimension_semantics=("parallel",)),
        cost_estimate=cost,
    )(x_p, *flat)

    return out[0, :B, None]                           # (B, 1)


net_forward = jax.jit(_net_forward,
                      static_argnames=("dims", "training", "block_b"))


def init_params(key, dimensions: int, layers: int = 4):
    """Matches the PyTorch module: Linear(dim//i, dim//(i+1)) for i=1..layers-1,
    then Linear(dim//layers, 1). Weights stored (in, out)."""
    params = []
    sizes = [(dimensions // i, dimensions // (i + 1)) for i in range(1, layers)]
    sizes.append((dimensions // layers, 1))
    for (fan_in, fan_out) in sizes:
        key, kw, kb = jax.random.split(key, 3)
        bound = 1.0 / np.sqrt(fan_in)
        w = jax.random.uniform(kw, (fan_in, fan_out), jnp.float32, -bound, bound)
        b = jax.random.uniform(kb, (fan_out,), jnp.float32, -bound, bound)
        params.append((w, b))
    return params


def net_forward_ref_quant(x, flat, *, training=False):
    """Pure-JAX reference mirroring the kernel's exact dtype path."""
    n_hidden = (len(flat) - 2) // 2
    h = x.astype(jnp.bfloat16)
    for li in range(n_hidden):
        w, b = flat[2 * li], flat[2 * li + 1]
        acc = jnp.dot(h, w, preferred_element_type=jnp.float32)
        h = jnp.maximum(acc.astype(jnp.bfloat16) + b, 0)
    wo_t, bo = flat[-2], flat[-1]
    y = lax.dot_general(wo_t, h, (((1,), (1,)), ((), ())),
                        preferred_element_type=jnp.float32)
    y = y[0:1, :] + bo[0, 0]
    if not training:
        y = jax.nn.sigmoid(y)
    return y[0, :, None]


def net_forward_ref_f32(x, params, *, training=False):
    """Full-precision reference of the original PyTorch forward."""
    h = x
    for (w, b) in params[:-1]:
        h = jnp.maximum(jnp.dot(h, w) + b, 0.0)
    wo, bo = params[-1]
    out = jnp.dot(h, wo) + bo
    if not training:
        out = jax.nn.sigmoid(out)
    return out


if __name__ == "__main__":
    # dimensions divisible by 1..4 so layer widths match the module:
    # 48 -> 24 -> 16 -> 12 -> 1
    DIMENSIONS = 48
    LAYERS = 4
    BATCH = 256          # small demo batch; tiled as 2 x 128-row grid steps

    key = jax.random.PRNGKey(0)
    key, kx = jax.random.split(key)
    x = jax.random.normal(kx, (BATCH, DIMENSIONS), jnp.float32)
    params = init_params(key, DIMENSIONS, LAYERS)

    flat, dims = prepare_params(params)        # one-time pad/cast (hoisted)

    # eval mode (module default when not training): sigmoid applied.
    out = net_forward(x, flat, dims=dims, training=False)
    out = jax.block_until_ready(out)
    assert out.shape == (BATCH, 1)

    # Exact-path check (same bf16/f32 mixed precision as the kernel).
    ref_q = net_forward_ref_quant(x, flat, training=False)
    np.testing.assert_allclose(np.asarray(out), np.asarray(ref_q),
                               rtol=1e-3, atol=1e-3)

    # Semantics check against the full-f32 PyTorch-equivalent math.
    ref_f = net_forward_ref_f32(x, params, training=False)
    np.testing.assert_allclose(np.asarray(out), np.asarray(ref_f),
                               rtol=5e-2, atol=5e-2)

    print("KERNEL_OK")
</pallas_src>

<mosaic_0001>
module attributes {stable_mosaic.version = 11 : i64} {
  func.func @net_kernel(%arg0: i32, %arg1: memref<128x48xf32, #tpu.memory_space<vmem>>, %arg2: memref<48x128xbf16, #tpu.memory_space<vmem>>, %arg3: memref<1x128xbf16, #tpu.memory_space<vmem>>, %arg4: memref<128x128xbf16, #tpu.memory_space<vmem>>, %arg5: memref<1x128xbf16, #tpu.memory_space<vmem>>, %arg6: memref<128x128xbf16, #tpu.memory_space<vmem>>, %arg7: memref<1x128xbf16, #tpu.memory_space<vmem>>, %arg8: memref<8x128xbf16, #tpu.memory_space<vmem>>, %arg9: memref<1x1xf32, #tpu.memory_space<vmem>>, %arg10: memref<1x128xf32, #tpu.memory_space<vmem>>) attributes {dimension_semantics = [#tpu.dimension_semantics<parallel>], iteration_bounds = array<i64: 2>, scalar_prefetch = 0 : i64, scratch_operands = 0 : i64, tpu.core_type = #tpu.core_type<tc>, window_params = [{transform_indices = @transform_0, window_bounds = array<i64: 128, 48>}, {pipeline_mode = #tpu.pipeline_mode<synchronous>, transform_indices = @transform_1, window_bounds = array<i64: 48, 128>}, {pipeline_mode = #tpu.pipeline_mode<synchronous>, transform_indices = @transform_2, window_bounds = array<i64: 1, 128>}, {pipeline_mode = #tpu.pipeline_mode<synchronous>, transform_indices = @transform_3, window_bounds = array<i64: 128, 128>}, {pipeline_mode = #tpu.pipeline_mode<synchronous>, transform_indices = @transform_4, window_bounds = array<i64: 1, 128>}, {pipeline_mode = #tpu.pipeline_mode<synchronous>, transform_indices = @transform_5, window_bounds = array<i64: 128, 128>}, {pipeline_mode = #tpu.pipeline_mode<synchronous>, transform_indices = @transform_6, window_bounds = array<i64: 1, 128>}, {pipeline_mode = #tpu.pipeline_mode<synchronous>, transform_indices = @transform_7, window_bounds = array<i64: 8, 128>}, {pipeline_mode = #tpu.pipeline_mode<synchronous>, transform_indices = @transform_8, window_bounds = array<i64: 1, 1>}, {transform_indices = @transform_9, window_bounds = array<i64: 1, 128>}]} {
    %c0 = arith.constant 0 : index
    %c0_0 = arith.constant 0 : index
    %0 = vector.load %arg1[%c0, %c0_0] : memref<128x48xf32, #tpu.memory_space<vmem>>, vector<128x48xf32>
    %1 = arith.truncf %0 : vector<128x48xf32> to vector<128x48xbf16>
    %c0_1 = arith.constant 0 : index
    %c0_2 = arith.constant 0 : index
    %2 = vector.load %arg2[%c0_1, %c0_2] : memref<48x128xbf16, #tpu.memory_space<vmem>>, vector<48x128xbf16>
    %cst = arith.constant dense<0.000000e+00> : vector<128x128xf32>
    %3 = tpu.matmul %1, %2, %cst {dimension_numbers = #tpu.dot_dimension_numbers<[1], [0], [0], [1], [0, 0, 1, 1], [], []>} : vector<128x48xbf16>, vector<48x128xbf16>, vector<128x128xf32> -> vector<128x128xf32>
    %4 = arith.truncf %3 : vector<128x128xf32> to vector<128x128xbf16>
    %c0_3 = arith.constant 0 : index
    %c0_4 = arith.constant 0 : index
    %5 = vector.load %arg3[%c0_3, %c0_4] : memref<1x128xbf16, #tpu.memory_space<vmem>>, vector<1x128xbf16>
    %6 = vector.broadcast %5 : vector<1x128xbf16> to vector<128x128xbf16>
    %7 = arith.addf %4, %6 : vector<128x128xbf16>
    %cst_5 = arith.constant 0.000000e+00 : bf16
    %8 = vector.broadcast %cst_5 : bf16 to vector<128x128xbf16>
    %9 = arith.maximumf %7, %8 : vector<128x128xbf16>
    %c0_6 = arith.constant 0 : index
    %c0_7 = arith.constant 0 : index
    %10 = vector.load %arg4[%c0_6, %c0_7] : memref<128x128xbf16, #tpu.memory_space<vmem>>, vector<128x128xbf16>
    %cst_8 = arith.constant dense<0.000000e+00> : vector<128x128xf32>
    %11 = tpu.matmul %9, %10, %cst_8 {dimension_numbers = #tpu.dot_dimension_numbers<[1], [0], [0], [1], [0, 0, 1, 1], [], []>} : vector<128x128xbf16>, vector<128x128xbf16>, vector<128x128xf32> -> vector<128x128xf32>
    %12 = arith.truncf %11 : vector<128x128xf32> to vector<128x128xbf16>
    %c0_9 = arith.constant 0 : index
    %c0_10 = arith.constant 0 : index
    %13 = vector.load %arg5[%c0_9, %c0_10] : memref<1x128xbf16, #tpu.memory_space<vmem>>, vector<1x128xbf16>
    %14 = vector.broadcast %13 : vector<1x128xbf16> to vector<128x128xbf16>
    %15 = arith.addf %12, %14 : vector<128x128xbf16>
    %cst_11 = arith.constant 0.000000e+00 : bf16
    %16 = vector.broadcast %cst_11 : bf16 to vector<128x128xbf16>
    %17 = arith.maximumf %15, %16 : vector<128x128xbf16>
    %c0_12 = arith.constant 0 : index
    %c0_13 = arith.constant 0 : index
    %18 = vector.load %arg6[%c0_12, %c0_13] : memref<128x128xbf16, #tpu.memory_space<vmem>>, vector<128x128xbf16>
    %cst_14 = arith.constant dense<0.000000e+00> : vector<128x128xf32>
    %19 = tpu.matmul %17, %18, %cst_14 {dimension_numbers = #tpu.dot_dimension_numbers<[1], [0], [0], [1], [0, 0, 1, 1], [], []>} : vector<128x128xbf16>, vector<128x128xbf16>, vector<128x128xf32> -> vector<128x128xf32>
    %20 = arith.truncf %19 : vector<128x128xf32> to vector<128x128xbf16>
    %c0_15 = arith.constant 0 : index
    %c0_16 = arith.constant 0 : index
    %21 = vector.load %arg7[%c0_15, %c0_16] : memref<1x128xbf16, #tpu.memory_space<vmem>>, vector<1x128xbf16>
    %22 = vector.broadcast %21 : vector<1x128xbf16> to vector<128x128xbf16>
    %23 = arith.addf %20, %22 : vector<128x128xbf16>
    %cst_17 = arith.constant 0.000000e+00 : bf16
    %24 = vector.broadcast %cst_17 : bf16 to vector<128x128xbf16>
    %25 = arith.maximumf %23, %24 : vector<128x128xbf16>
    %c0_18 = arith.constant 0 : index
    %c0_19 = arith.constant 0 : index
    %26 = vector.load %arg8[%c0_18, %c0_19] : memref<8x128xbf16, #tpu.memory_space<vmem>>, vector<8x128xbf16>
    %cst_20 = arith.constant dense<0.000000e+00> : vector<8x128xf32>
    %27 = tpu.matmul %26, %25, %cst_20 {dimension_numbers = #tpu.dot_dimension_numbers<[1], [1], [0], [0], [0, 0, 1, 0], [], []>} : vector<8x128xbf16>, vector<128x128xbf16>, vector<8x128xf32> -> vector<8x128xf32>
    %28 = vector.extract_strided_slice %27 {offsets = [0, 0], sizes = [1, 128], strides = [1, 1]} : vector<8x128xf32> to vector<1x128xf32>
    %c0_21 = arith.constant 0 : index
    %c0_22 = arith.constant 0 : index
    %29 = vector.load %arg9[%c0_21, %c0_22] : memref<1x1xf32, #tpu.memory_space<vmem>>, vector<1x1xf32>
    %30 = vector.broadcast %29 : vector<1x1xf32> to vector<1x128xf32>
    %31 = arith.addf %28, %30 : vector<1x128xf32>
    %32 = arith.negf %31 : vector<1x128xf32>
    %33 = math.exp %32 : vector<1x128xf32>
    %cst_23 = arith.constant 1.000000e+00 : f32
    %34 = vector.broadcast %cst_23 : f32 to vector<1x128xf32>
    %35 = arith.addf %34, %33 : vector<1x128xf32>
    %36 = arith.divf %34, %35 : vector<1x128xf32>
    %c0_24 = arith.constant 0 : index
    %c0_25 = arith.constant 0 : index
    %37 = vector.load %arg10[%c0_24, %c0_25] : memref<1x128xf32, #tpu.memory_space<vmem>>, vector<1x128xf32>
    tpu.vector_store %arg10[%c0_24, %c0_25], %36 {strides = array<i32>} : memref<1x128xf32, #tpu.memory_space<vmem>>, vector<1x128xf32>,
    return
  }
  func.func @transform_0(%arg0: i32) -> (i32, i32) {
    %c0_i32 = arith.constant 0 : i32
    %c0_i32_0 = arith.constant 0 : i32
    return %arg0, %c0_i32 : i32, i32
  }
  func.func @transform_1(%arg0: i32) -> (i32, i32) {
    %c0_i32 = arith.constant 0 : i32
    %c0_i32_0 = arith.constant 0 : i32
    %c0_i32_1 = arith.constant 0 : i32
    return %c0_i32, %c0_i32_0 : i32, i32
  }
  func.func @transform_2(%arg0: i32) -> (i32, i32) {
    %c0_i32 = arith.constant 0 : i32
    %c0_i32_0 = arith.constant 0 : i32
    %c0_i32_1 = arith.constant 0 : i32
    return %c0_i32, %c0_i32_0 : i32, i32
  }
  func.func @transform_3(%arg0: i32) -> (i32, i32) {
    %c0_i32 = arith.constant 0 : i32
    %c0_i32_0 = arith.constant 0 : i32
    %c0_i32_1 = arith.constant 0 : i32
    return %c0_i32, %c0_i32_0 : i32, i32
  }
  func.func @transform_4(%arg0: i32) -> (i32, i32) {
    %c0_i32 = arith.constant 0 : i32
    %c0_i32_0 = arith.constant 0 : i32
    %c0_i32_1 = arith.constant 0 : i32
    return %c0_i32, %c0_i32_0 : i32, i32
  }
  func.func @transform_5(%arg0: i32) -> (i32, i32) {
    %c0_i32 = arith.constant 0 : i32
    %c0_i32_0 = arith.constant 0 : i32
    %c0_i32_1 = arith.constant 0 : i32
    return %c0_i32, %c0_i32_0 : i32, i32
  }
  func.func @transform_6(%arg0: i32) -> (i32, i32) {
    %c0_i32 = arith.constant 0 : i32
    %c0_i32_0 = arith.constant 0 : i32
    %c0_i32_1 = arith.constant 0 : i32
    return %c0_i32, %c0_i32_0 : i32, i32
  }
  func.func @transform_7(%arg0: i32) -> (i32, i32) {
    %c0_i32 = arith.constant 0 : i32
    %c0_i32_0 = arith.constant 0 : i32
    %c0_i32_1 = arith.constant 0 : i32
    return %c0_i32, %c0_i32_0 : i32, i32
  }
  func.func @transform_8(%arg0: i32) -> (i32, i32) {
    %c0_i32 = arith.constant 0 : i32
    %c0_i32_0 = arith.constant 0 : i32
    %c0_i32_1 = arith.constant 0 : i32
    return %c0_i32, %c0_i32_0 : i32, i32
  }
  func.func @transform_9(%arg0: i32) -> (i32, i32) {
    %c0_i32 = arith.constant 0 : i32
    %c0_i32_0 = arith.constant 0 : i32
    return %c0_i32, %arg0 : i32, i32
  }
}

</mosaic_0001>

<llo_original>
// kernel: _net_forward.1
$region0: #{_net_forward.1}
  #allocation0 [shape = 'u32[]', space=smem, size = 0x4, offset = 0x4, fixed_abs, tag = 'smem constant byte address 0x4 - core index']
  #allocation1 [shape = 'u32[144,128]{1,0:T(1,128)}', space=vmem, size = 0x12000, scoped, tag = 'internal scratch']
  #allocation2 [shape = 'f32[1,1]{1,0:T(1,128)S(1)}', space=vmem, size = 0x200, scoped, tag = 'scoped memory for _net_forward.1']
  %s0 = inlined_call_operand.vmem [shape: f32[256,48], index: 0, kind: input, shape index: {}]
  %s1 = inlined_call_operand.vmem [shape: bf16[48,128], index: 1, kind: input, shape index: {}]
  %s2 = inlined_call_operand.vmem [shape: bf16[1,128], index: 2, kind: input, shape index: {}]
  %s3 = inlined_call_operand.vmem [shape: bf16[128,128], index: 3, kind: input, shape index: {}]
  %s4 = inlined_call_operand.vmem [shape: bf16[1,128], index: 4, kind: input, shape index: {}]
  %s5 = inlined_call_operand.vmem [shape: bf16[128,128], index: 5, kind: input, shape index: {}]
  %s6 = inlined_call_operand.vmem [shape: bf16[1,128], index: 6, kind: input, shape index: {}]
  %s7 = inlined_call_operand.vmem [shape: bf16[8,128], index: 7, kind: input, shape index: {}]
  %s8 = inlined_call_operand.<no memory space> [shape: f32[1,1], index: 8, kind: input, shape index: {}]
  %s9 = inlined_call_operand.hbm [shape: f32[1,256], index: 9, kind: output, shape index: {}]
  %s10 = sld [smem:[#allocation0]]
  $region69: #{_net_forward.1} parent=0
    _
  %s12 = ssub.s32 1, %s10
  %s13 = scalar_select 0, %s12, %s10
  %v14 = vstv %s8
  %15 = vst [vmem:[#allocation2] sm:$0x1] %v14
  $region1: #{_net_forward.1} parent=0
    #allocation3 [shape = 'u8[1024]{0}', space=vmem, size = 0x400, scoped, tag = 'output window, operand 0']
    #allocation4 [shape = 's32[2]{0}', space=sflag, size = 0x8, scoped, tag = 'scoped memory for _net_forward.1']
    %16 = vsyncpa [#allocation4], 0
    %s17 = scalar_lea.sflag [#allocation4], 1
    %18 = vsyncpa %s17, 0
    loop: start=0, step=1, limit=4
    $region2: #{_net_forward.1} parent=1 // loop_pre_header
      _
    $region3: #{_net_forward.1} parent=1 // loop_header
      %s20 = sphi 0, %s24
      %p21 = scmp.ge.s32.totalorder %s20, 4
      %s30 = sphi 0, %s32
      %s33 = sphi 0, %s30
      %s34 = sphi 0, %s33
      %s50 = sphi 0, %s34
      %s54 = sphi 0, %s54
      %s56 = sphi 0, %s54
      %s57 = sphi 0, %s56
      %s71 = sphi 0, %s57
      %s75 = sphi 0, %s75
      %s77 = sphi 0, %s75
      %s78 = sphi 0, %s77
      %s92 = sphi 0, %s78
      %s96 = sphi 0, %s96
      %s98 = sphi 0, %s96
      %s99 = sphi 0, %s98
      %s113 = sphi 0, %s99
      %s117 = sphi 0, %s117
      %s119 = sphi 0, %s117
      %s120 = sphi 0, %s119
      %s134 = sphi 0, %s120
      %s138 = sphi 0, %s138
      %s140 = sphi 0, %s138
      %s141 = sphi 0, %s140
      %s155 = sphi 0, %s141
      %s159 = sphi 0, %s159
      %s161 = sphi 0, %s159
      %s162 = sphi 0, %s161
      %s176 = sphi 0, %s162
      %s180 = sphi 0, %s180
      %s182 = sphi 0, %s180
      %s183 = sphi 0, %s182
      %s197 = sphi 0, %s183
      %s201 = sphi 0, %s201
      %s203 = sphi 0, %s201
      %s204 = sphi 0, %s203
      %s218 = sphi 0, %s204
      %s224 = sphi 0, %s226
      %s227 = sphi 0, %s224
      %s228 = sphi 0, %s227
      %s244 = sphi 0, %s228
    $region4: #{_net_forward.1} parent=1 // loop_header_branch
      %23 = sbr.rel (%p21) target = $region8
    $region5: #{_net_forward.1} parent=1 // loop_body
      %s25 = ssub.s32 %s20, 1
      %s26 = ssub.s32 %s20, 2
      %s27 = sadd.s32 %s20, 1
      %s28 = ssub.s32 %s20, %s27
      %p29 = scmp.eq.s32.totalorder %s28, 0
      %s31 = sadd.s32 %s30, 1
      %s32 = scalar_select %p29, %s30, %s31
      %p35 = pneg %p29
      %p36 = scmp.eq.s32.totalorder %s20, 1
      %p37 = por %p35, %p36
      %p38 = scmp.ne.s32.totalorder %s30, %s33
      %p39 = scmp.eq.s32.totalorder %s20, 0
      %p40 = por %p38, %p39
      %p41 = scmp.ne.s32.totalorder %s30, %s33
      %p42 = scmp.eq.s32.totalorder %s25, 1
      %p43 = por %p41, %p42
      %p44 = scmp.ne.s32.totalorder %s33, %s34
      %p45 = scmp.eq.s32.totalorder %s25, 0
      %p46 = por %p44, %p45
      %p47 = scmp.ne.s32.totalorder %s33, %s34
      %p48 = scmp.eq.s32.totalorder %s26, 1
      %p49 = por %p47, %p48
      %p51 = scmp.ne.s32.totalorder %s34, %s50
      %p52 = scmp.eq.s32.totalorder %s26, 0
      %p53 = por %p51, %p52
      %s55 = sadd.s32 %s54, 1
      %p58 = scmp.eq.s32.totalorder %s20, 1
      %p59 = scmp.ne.s32.totalorder %s54, %s56
      %p60 = scmp.eq.s32.totalorder %s20, 0
      %p61 = por %p59, %p60
      %p62 = scmp.ne.s32.totalorder %s54, %s56
      %p63 = scmp.eq.s32.totalorder %s25, 1
      %p64 = por %p62, %p63
      %p65 = scmp.ne.s32.totalorder %s56, %s57
      %p66 = scmp.eq.s32.totalorder %s25, 0
      %p67 = por %p65, %p66
      %p68 = scmp.ne.s32.totalorder %s56, %s57
      %p69 = scmp.eq.s32.totalorder %s26, 1
      %p70 = por %p68, %p69
      %p72 = scmp.ne.s32.totalorder %s57, %s71
      %p73 = scmp.eq.s32.totalorder %s26, 0
      %p74 = por %p72, %p73
      %s76 = sadd.s32 %s75, 1
      %p79 = scmp.eq.s32.totalorder %s20, 1
      %p80 = scmp.ne.s32.totalorder %s75, %s77
      %p81 = scmp.eq.s32.totalorder %s20, 0
      %p82 = por %p80, %p81
      %p83 = scmp.ne.s32.totalorder %s75, %s77
      %p84 = scmp.eq.s32.totalorder %s25, 1
      %p85 = por %p83, %p84
      %p86 = scmp.ne.s32.totalorder %s77, %s78
      %p87 = scmp.eq.s32.totalorder %s25, 0
      %p88 = por %p86, %p87
      %p89 = scmp.ne.s32.totalorder %s77, %s78
      %p90 = scmp.eq.s32.totalorder %s26, 1
      %p91 = por %p89, %p90
      %p93 = scmp.ne.s32.totalorder %s78, %s92
      %p94 = scmp.eq.s32.totalorder %s26, 0
      %p95 = por %p93, %p94
      %s97 = sadd.s32 %s96, 1
      %p100 = scmp.eq.s32.totalorder %s20, 1
      %p101 = scmp.ne.s32.totalorder %s96, %s98
      %p102 = scmp.eq.s32.totalorder %s20, 0
      %p103 = por %p101, %p102
      %p104 = scmp.ne.s32.totalorder %s96, %s98
      %p105 = scmp.eq.s32.totalorder %s25, 1
      %p106 = por %p104, %p105
      %p107 = scmp.ne.s32.totalorder %s98, %s99
      %p108 = scmp.eq.s32.totalorder %s25, 0
      %p109 = por %p107, %p108
      %p110 = scmp.ne.s32.totalorder %s98, %s99
      %p111 = scmp.eq.s32.totalorder %s26, 1
      %p112 = por %p110, %p111
      %p114 = scmp.ne.s32.totalorder %s99, %s113
      %p115 = scmp.eq.s32.totalorder %s26, 0
      %p116 = por %p114, %p115
      %s118 = sadd.s32 %s117, 1
      %p121 = scmp.eq.s32.totalorder %s20, 1
      %p122 = scmp.ne.s32.totalorder %s117, %s119
      %p123 = scmp.eq.s32.totalorder %s20, 0
      %p124 = por %p122, %p123
      %p125 = scmp.ne.s32.totalorder %s117, %s119
      %p126 = scmp.eq.s32.totalorder %s25, 1
      %p127 = por %p125, %p126
      %p128 = scmp.ne.s32.totalorder %s119, %s120
      %p129 = scmp.eq.s32.totalorder %s25, 0
      %p130 = por %p128, %p129
      %p131 = scmp.ne.s32.totalorder %s119, %s120
      %p132 = scmp.eq.s32.totalorder %s26, 1
      %p133 = por %p131, %p132
      %p135 = scmp.ne.s32.totalorder %s120, %s134
      %p136 = scmp.eq.s32.totalorder %s26, 0
      %p137 = por %p135, %p136
      %s139 = sadd.s32 %s138, 1
      %p142 = scmp.eq.s32.totalorder %s20, 1
      %p143 = scmp.ne.s32.totalorder %s138, %s140
      %p144 = scmp.eq.s32.totalorder %s20, 0
      %p145 = por %p143, %p144
      %p146 = scmp.ne.s32.totalorder %s138, %s140
      %p147 = scmp.eq.s32.totalorder %s25, 1
      %p148 = por %p146, %p147
      %p149 = scmp.ne.s32.totalorder %s140, %s141
      %p150 = scmp.eq.s32.totalorder %s25, 0
      %p151 = por %p149, %p150
      %p152 = scmp.ne.s32.totalorder %s140, %s141
      %p153 = scmp.eq.s32.totalorder %s26, 1
      %p154 = por %p152, %p153
      %p156 = scmp.ne.s32.totalorder %s141, %s155
      %p157 = scmp.eq.s32.totalorder %s26, 0
      %p158 = por %p156, %p157
      %s160 = sadd.s32 %s159, 1
      %p163 = scmp.eq.s32.totalorder %s20, 1
      %p164 = scmp.ne.s32.totalorder %s159, %s161
      %p165 = scmp.eq.s32.totalorder %s20, 0
      %p166 = por %p164, %p165
      %p167 = scmp.ne.s32.totalorder %s159, %s161
      %p168 = scmp.eq.s32.totalorder %s25, 1
      %p169 = por %p167, %p168
      %p170 = scmp.ne.s32.totalorder %s161, %s162
      %p171 = scmp.eq.s32.totalorder %s25, 0
      %p172 = por %p170, %p171
      %p173 = scmp.ne.s32.totalorder %s161, %s162
      %p174 = scmp.eq.s32.totalorder %s26, 1
      %p175 = por %p173, %p174
      %p177 = scmp.ne.s32.totalorder %s162, %s176
      %p178 = scmp.eq.s32.totalorder %s26, 0
      %p179 = por %p177, %p178
      %s181 = sadd.s32 %s180, 1
      %p184 = scmp.eq.s32.totalorder %s20, 1
      %p185 = scmp.ne.s32.totalorder %s180, %s182
      %p186 = scmp.eq.s32.totalorder %s20, 0
      %p187 = por %p185, %p186
      %p188 = scmp.ne.s32.totalorder %s180, %s182
      %p189 = scmp.eq.s32.totalorder %s25, 1
      %p190 = por %p188, %p189
      %p191 = scmp.ne.s32.totalorder %s182, %s183
      %p192 = scmp.eq.s32.totalorder %s25, 0
      %p193 = por %p191, %p192
      %p194 = scmp.ne.s32.totalorder %s182, %s183
      %p195 = scmp.eq.s32.totalorder %s26, 1
      %p196 = por %p194, %p195
      %p198 = scmp.ne.s32.totalorder %s183, %s197
      %p199 = scmp.eq.s32.totalorder %s26, 0
      %p200 = por %p198, %p199
      %s202 = sadd.s32 %s201, 1
      %p205 = scmp.eq.s32.totalorder %s20, 1
      %p206 = scmp.ne.s32.totalorder %s201, %s203
      %p207 = scmp.eq.s32.totalorder %s20, 0
      %p208 = por %p206, %p207
      %p209 = scmp.ne.s32.totalorder %s201, %s203
      %p210 = scmp.eq.s32.totalorder %s25, 1
      %p211 = por %p209, %p210
      %p212 = scmp.ne.s32.totalorder %s203, %s204
      %p213 = scmp.eq.s32.totalorder %s25, 0
      %p214 = por %p212, %p213
      %p215 = scmp.ne.s32.totalorder %s203, %s204
      %p216 = scmp.eq.s32.totalorder %s26, 1
      %p217 = por %p215, %p216
      %p219 = scmp.ne.s32.totalorder %s204, %s218
      %p220 = scmp.eq.s32.totalorder %s26, 0
      %p221 = por %p219, %p220
      %s222 = ssub.s32 %s20, %s27
      %p223 = scmp.eq.s32.totalorder %s222, 0
      %s225 = sadd.s32 %s224, 1
      %s226 = scalar_select %p223, %s224, %s225
      %p229 = pneg %p223
      %p230 = scmp.eq.s32.totalorder %s20, 1
      %p231 = por %p229, %p230
      %p232 = scmp.ne.s32.totalorder %s224, %s227
      %p233 = scmp.eq.s32.totalorder %s20, 0
      %p234 = por %p232, %p233
      %p235 = scmp.ne.s32.totalorder %s224, %s227
      %p236 = scmp.eq.s32.totalorder %s25, 1
      %p237 = por %p235, %p236
      %p238 = scmp.ne.s32.totalorder %s227, %s228
      %p239 = scmp.eq.s32.totalorder %s25, 0
      %p240 = por %p238, %p239
      %p241 = scmp.ne.s32.totalorder %s227, %s228
      %p242 = scmp.eq.s32.totalorder %s26, 1
      %p243 = por %p241, %p242
      %p245 = scmp.ne.s32.totalorder %s228, %s244
      %p246 = scmp.eq.s32.totalorder %s26, 0
      %p247 = por %p245, %p246
      %p248 = scmp.le.s32.totalorder 1, %s20
      %p249 = scmp.lt.s32.totalorder %s20, 3
      %p250 = pnand %p248, %p249
      %p251 = pneg %p250
      // Predicated region
      $region9: #{_net_forward.1} parent=5 // pred_check
        _
      $region10: #{_net_forward.1} parent=5 // pred_check_branch
        %253 = sbr.rel (%p250) target = $region12
      $region11: #{_net_forward.1} parent=5 // pred_region
        %s254 = ssub.s32 %s20, 1
        // Predicated region
        $region13: #{_net_forward.1} parent=11 // pred_check
          %p255 = pneg %p67
        $region14: #{_net_forward.1} parent=11 // pred_check_branch
          %257 = sbr.rel (%p255) target = $region16
        $region15: #{_net_forward.1} parent=11 // pred_region
          _
        $region16: #{_net_forward.1} parent=11 // pred_fallthru
          _
        // Predicated region
        $region17: #{_net_forward.1} parent=11 // pred_check
          %p258 = pneg %p88
        $region18: #{_net_forward.1} parent=11 // pred_check_branch
          %260 = sbr.rel (%p258) target = $region20
        $region19: #{_net_forward.1} parent=11 // pred_region
          _
        $region20: #{_net_forward.1} parent=11 // pred_fallthru
          _
        // Predicated region
        $region21: #{_net_forward.1} parent=11 // pred_check
          %p261 = pneg %p109
        $region22: #{_net_forward.1} parent=11 // pred_check_branch
          %263 = sbr.rel (%p261) target = $region24
        $region23: #{_net_forward.1} parent=11 // pred_region
          _
        $region24: #{_net_forward.1} parent=11 // pred_fallthru
          _
        // Predicated region
        $region25: #{_net_forward.1} parent=11 // pred_check
          %p264 = pneg %p130
        $region26: #{_net_forward.1} parent=11 // pred_check_branch
          %266 = sbr.rel (%p264) target = $region28
        $region27: #{_net_forward.1} parent=11 // pred_region
          _
        $region28: #{_net_forward.1} parent=11 // pred_fallthru
          _
        // Predicated region
        $region29: #{_net_forward.1} parent=11 // pred_check
          %p267 = pneg %p151
        $region30: #{_net_forward.1} parent=11 // pred_check_branch
          %269 = sbr.rel (%p267) target = $region32
        $region31: #{_net_forward.1} parent=11 // pred_region
          _
        $region32: #{_net_forward.1} parent=11 // pred_fallthru
          _
        // Predicated region
        $region33: #{_net_forward.1} parent=11 // pred_check
          %p270 = pneg %p172
        $region34: #{_net_forward.1} parent=11 // pred_check_branch
          %272 = sbr.rel (%p270) target = $region36
        $region35: #{_net_forward.1} parent=11 // pred_region
          _
        $region36: #{_net_forward.1} parent=11 // pred_fallthru
          _
        // Predicated region
        $region37: #{_net_forward.1} parent=11 // pred_check
          %p273 = pneg %p193
        $region38: #{_net_forward.1} parent=11 // pred_check_branch
          %275 = sbr.rel (%p273) target = $region40
        $region39: #{_net_forward.1} parent=11 // pred_region
          _
        $region40: #{_net_forward.1} parent=11 // pred_fallthru
          _
        // Predicated region
        $region41: #{_net_forward.1} parent=11 // pred_check
          %p276 = pneg %p214
        $region42: #{_net_forward.1} parent=11 // pred_check_branch
          %278 = sbr.rel (%p276) target = $region44
        $region43: #{_net_forward.1} parent=11 // pred_region
          _
        $region44: #{_net_forward.1} parent=11 // pred_fallthru
          _
      $region12: #{_net_forward.1} parent=5 // pred_fallthru
        _
      %p279 = scmp.lt.s32.totalorder %s20, 2
      // Predicated region
      $region45: #{_net_forward.1} parent=5 // pred_check
        %p280 = pneg %p279
      $region46: #{_net_forward.1} parent=5 // pred_check_branch
        %282 = sbr.rel (%p280) target = $region48
      $region47: #{_net_forward.1} parent=5 // pred_region
        // Predicated region
        $region49: #{_net_forward.1} parent=47 // pred_check
          %p283 = pneg %p40
        $region50: #{_net_forward.1} parent=47 // pred_check_branch
          %285 = sbr.rel (%p283) target = $region52
        $region51: #{_net_forward.1} parent=47 // pred_region
          %s286 = smul.u32 16, %s20
          %p287 = scmp.lt.s32.totalorder %s286, 31
          %s288 = scalar_select %p287, %s286, 31
          %s289 = smul.addr %s288, 8
          %s290 = scalar_lea.vmem %s0, %s289
          %s291 = smul.u32 16, %s20
        $region52: #{_net_forward.1} parent=47 // pred_fallthru
          _
      $region48: #{_net_forward.1} parent=5 // pred_fallthru
        _
      %p292 = scmp.le.s32.totalorder 1, %s20
      %p293 = scmp.lt.s32.totalorder %s20, 3
      %p294 = pnand %p292, %p293
      %p295 = pneg %p294
      // Predicated region
      $region53: #{_net_forward.1} parent=5 // pred_check
        _
      $region54: #{_net_forward.1} parent=5 // pred_check_branch
        %297 = sbr.rel (%p294) target = $region56
      $region55: #{_net_forward.1} parent=5 // pred_region
        %s298 = ssub.s32 %s20, 1
        %s299 = smul.u32 16, %s25
        %p300 = scmp.lt.s32.totalorder %s299, 31
        %s301 = scalar_select %p300, %s299, 31
        %s302 = smul.addr %s301, 8
        %s303 = scalar_lea.vmem %s0, %s302
        %p304 = pneg %p46
        %p305 = pneg %p43
        %p306 = pneg %p67
        %p307 = pneg %p64
        %p308 = pneg %p88
        %p309 = pneg %p85
        %p310 = pneg %p109
        %p311 = pneg %p106
        %p312 = pneg %p130
        %p313 = pneg %p127
        %p314 = pneg %p151
        %p315 = pneg %p148
        %p316 = pneg %p172
        %p317 = pneg %p169
        %p318 = pneg %p193
        %p319 = pneg %p190
        %p320 = pneg %p214
        %p321 = pneg %p211
        %p322 = pneg %p240
        %p323 = pneg %p237
        %s324 = sand.u32 %s227, 1
        %s325 = scalar_lea.sflag [#allocation4], %s324
        %s326 = sand.u32 %s227, 1
        %s327 = scalar_lea.vmem [#allocation3], %s326
        %s328 = smul.u32 16, %s25
        %p329 = scmp.lt.s32.totalorder %s328, 31
        %s330 = scalar_select %p329, %s328, 31
        %s331 = smul.addr %s330, 8
        %s332 = scalar_lea.vmem %s0, %s331
        %s333 = smul.u32 16, %s25
        %v335 = vld [vmem:[%s332] sm:$0xff]
        %v336 = vld [vmem:[%s332 + $0x8] sm:$0xff]
        %v337 = vld [vmem:[%s332 + $0x10] sm:$0xff]
        %v338 = vld [vmem:[%s332 + $0x18] sm:$0xff]
        %v339 = vld [vmem:[%s332 + $0x20] sm:$0xff]
        %v340 = vld [vmem:[%s332 + $0x28] sm:$0xff]
        %v341 = vld [vmem:[%s332 + $0x30] sm:$0xff]
        %v342 = vld [vmem:[%s332 + $0x38] sm:$0xff]
        %v343 = vld [vmem:[%s332 + $0x40] sm:$0xff]
        %v344 = vld [vmem:[%s332 + $0x48] sm:$0xff]
        %v345 = vld [vmem:[%s332 + $0x50] sm:$0xff]
        %v346 = vld [vmem:[%s332 + $0x58] sm:$0xff]
        %v347 = vld [vmem:[%s332 + $0x60] sm:$0xff]
        %v348 = vld [vmem:[%s332 + $0x68] sm:$0xff]
        %v349 = vld [vmem:[%s332 + $0x70] sm:$0xff]
        %v350 = vld [vmem:[%s332 + $0x78] sm:$0xff]
        %v351 = vpack.c.bf16 %v336, %v335
        %v352 = vpack.c.bf16 %v338, %v337
        %v353 = vpack.c.bf16 %v340, %v339
        %v354 = vpack.c.bf16 %v342, %v341
        %v355 = vpack.c.bf16 %v344, %v343
        %v356 = vpack.c.bf16 %v346, %v345
        %v357 = vpack.c.bf16 %v348, %v347
        %v358 = vpack.c.bf16 %v350, %v349
        %v359 = vld [vmem:[%s1] sm:$0xf]
        %v360 = vld [vmem:[%s1 + $0x4] sm:$0xf]
        %v361 = vld [vmem:[%s1 + $0x8] sm:$0xf]
        %v362 = vld [vmem:[%s1 + $0xc] sm:$0xf]
        %v363 = vld [vmem:[%s1 + $0x10] sm:$0xf]
        %v364 = vld [vmem:[%s1 + $0x14] sm:$0xf]
        %v371 = vunpack.c.l.b16 %v359
        %v372 = vunpack.c.l.b16 %v360
        %v373 = vunpack.c.l.b16 %v361
        %v374 = vunpack.c.l.b16 %v362
        %v375 = vunpack.c.l.b16 %v363
        %v376 = vunpack.c.l.b16 %v364
        %v377 = vpack.c.b16 %v372, %v371
        %v378 = vpack.c.b16 %v374, %v373
        %v379 = vpack.c.b16 %v376, %v375
        %vm383 = vcmask 392192
        %v385 = vsel %vm383, %v351, 0
        %v388 = vsel %vm383, %v352, 0
        %v391 = vsel %vm383, %v353, 0
        %v394 = vsel %vm383, %v354, 0
        %v397 = vsel %vm383, %v355, 0
        %v400 = vsel %vm383, %v356, 0
        %v403 = vsel %vm383, %v357, 0
        %v406 = vsel %vm383, %v358, 0
        %408 = vmatprep.subr.bf16.mxu0 0
        %409 = vmatpush1.bf16.msra.mxu0 0
        %410 = vmatprep.subr.bf16.mxu0 0
        %411 = vmatpush1.bf16.msra.mxu0 0
        %412 = vmatprep.subr.bf16.mxu0 0
        %413 = vmatpush1.bf16.msra.mxu0 0
        %414 = vmatprep.subr.bf16.mxu0 0
        %415 = vmatpush1.bf16.msra.mxu0 0
        %416 = vmatprep.subr.bf16.mxu0 0
        %417 = vmatpush1.bf16.msra.mxu0 0
        %418 = vmatprep.subr.bf16.mxu0 0
        %419 = vmatpush1.bf16.msra.mxu0 %v379
        %420 = vmatprep.subr.bf16.mxu0 0
        %421 = vmatpush1.bf16.msra.mxu0 %v378
        %422 = vmatprep.subr.bf16.mxu0 0
        %423 = vmatpush1.bf16.msra.mxu0 %v377
        %424 = vmatprep.subr.bf16.mxu0 0
        %425 = vmatpush2.bf16.msra.mxu0 0
        %426 = vmatprep.subr.bf16.mxu0 0
        %427 = vmatpush2.bf16.msra.mxu0 0
        %428 = vmatprep.subr.bf16.mxu0 0
        %429 = vmatpush2.bf16.msra.mxu0 0
        %430 = vmatprep.subr.bf16.mxu0 0
        %431 = vmatpush2.bf16.msra.mxu0 0
        %432 = vmatprep.subr.bf16.mxu0 0
        %433 = vmatpush2.bf16.msra.mxu0 0
        %434 = vmatprep.subr.bf16.mxu0 0
        %435 = vmatpush2.bf16.msra.mxu0 0
        %436 = vmatprep.subr.bf16.mxu0 0
        %437 = vmatpush2.bf16.msra.mxu0 0
        %438 = vmatprep.subr.bf16.mxu0 0
        %439 = vmatpush2.bf16.msra.mxu0 0
        %440 = vmatprep.mubr.bf16.mxu0 0
        %441 = vmatmul.mubr.bf16.gmra.mxu0 %v385
        %v442 = vpop.f32.mrf.mxu0
        %v443 = vadd.f32 0.0, %v442
        %v444 = vpop.f32.mrf.mxu0
        %v445 = vpop.f32.mrf.mxu0
        %v446 = vadd.f32 0.0, %v445
        %v447 = vpop.f32.mrf.mxu0
        %448 = vmatprep.mubr.bf16.mxu0 0
        %449 = vmatmul.mubr.bf16.gmra.mxu0 %v388
        %v450 = vpop.f32.mrf.mxu0
        %v451 = vadd.f32 0.0, %v450
        %v452 = vpop.f32.mrf.mxu0
        %v453 = vpop.f32.mrf.mxu0
        %v454 = vadd.f32 0.0, %v453
        %v455 = vpop.f32.mrf.mxu0
        %456 = vmatprep.mubr.bf16.mxu0 0
        %457 = vmatmul.mubr.bf16.gmra.mxu0 %v391
        %v458 = vpop.f32.mrf.mxu0
        %v459 = vadd.f32 0.0, %v458
        %v460 = vpop.f32.mrf.mxu0
        %v461 = vpop.f32.mrf.mxu0
        %v462 = vadd.f32 0.0, %v461
        %v463 = vpop.f32.mrf.mxu0
        %464 = vmatprep.mubr.bf16.mxu0 0
        %465 = vmatmul.mubr.bf16.gmra.mxu0 %v394
        %v466 = vpop.f32.mrf.mxu0
        %v467 = vadd.f32 0.0, %v466
        %v468 = vpop.f32.mrf.mxu0
        %v469 = vpop.f32.mrf.mxu0
        %v470 = vadd.f32 0.0, %v469
        %v471 = vpop.f32.mrf.mxu0
        %472 = vmatprep.mubr.bf16.mxu0 0
        %473 = vmatmul.mubr.bf16.gmra.mxu0 %v397
        %v474 = vpop.f32.mrf.mxu0
        %v475 = vadd.f32 0.0, %v474
        %v476 = vpop.f32.mrf.mxu0
        %v477 = vpop.f32.mrf.mxu0
        %v478 = vadd.f32 0.0, %v477
        %v479 = vpop.f32.mrf.mxu0
        %480 = vmatprep.mubr.bf16.mxu0 0
        %481 = vmatmul.mubr.bf16.gmra.mxu0 %v400
        %v482 = vpop.f32.mrf.mxu0
        %v483 = vadd.f32 0.0, %v482
        %v484 = vpop.f32.mrf.mxu0
        %v485 = vpop.f32.mrf.mxu0
        %v486 = vadd.f32 0.0, %v485
        %v487 = vpop.f32.mrf.mxu0
        %488 = vmatprep.mubr.bf16.mxu0 0
        %489 = vmatmul.mubr.bf16.gmra.mxu0 %v403
        %v490 = vpop.f32.mrf.mxu0
        %v491 = vadd.f32 0.0, %v490
        %v492 = vpop.f32.mrf.mxu0
        %v493 = vpop.f32.mrf.mxu0
        %v494 = vadd.f32 0.0, %v493
        %v495 = vpop.f32.mrf.mxu0
        %496 = vmatprep.mubr.bf16.mxu0 0
        %497 = vmatmul.mubr.bf16.gmra.mxu0 %v406
        %v498 = vpop.f32.mrf.mxu0
        %v499 = vadd.f32 0.0, %v498
        %v500 = vpop.f32.mrf.mxu0
        %v501 = vpop.f32.mrf.mxu0
        %v502 = vadd.f32 0.0, %v501
        %v503 = vpop.f32.mrf.mxu0
        %504 = vdwg.mxu0
        %v505 = vpack.c.bf16 %v446, %v443
        %v506 = vpack.c.bf16 %v454, %v451
        %v507 = vpack.c.bf16 %v462, %v459
        %v508 = vpack.c.bf16 %v470, %v467
        %v509 = vpack.c.bf16 %v478, %v475
        %v510 = vpack.c.bf16 %v486, %v483
        %v511 = vpack.c.bf16 %v494, %v491
        %v512 = vpack.c.bf16 %v502, %v499
        %v513 = vld [vmem:[%s2] sm:$0x1]
        %v515 = vpack.i.b16 %v513, %v513
        %v517 = vlaneseq
        %v518 = vshrl.u32 %v517, 7
        %v519 = vsub.s32 0, %v518
        %v520 = vrot.slane %v515, %v519
        %v521 = vadd.bf16 %v505, %v520
        %v522 = vadd.bf16 %v506, %v520
        %v523 = vadd.bf16 %v507, %v520
        %v524 = vadd.bf16 %v508, %v520
        %v525 = vadd.bf16 %v509, %v520
        %v526 = vadd.bf16 %v510, %v520
        %v527 = vadd.bf16 %v511, %v520
        %v528 = vadd.bf16 %v512, %v520
        %v529 = vmax.bf16 %v521, 0
        %v530 = vmax.bf16 %v522, 0
        %v531 = vmax.bf16 %v523, 0
        %v532 = vmax.bf16 %v524, 0
        %v533 = vmax.bf16 %v525, 0
        %v534 = vmax.bf16 %v526, 0
        %v535 = vmax.bf16 %v527, 0
        %v536 = vmax.bf16 %v528, 0
        %v537 = vld [vmem:[%s3] sm:$0xf]
        %v538 = vld [vmem:[%s3 + $0x4] sm:$0xf]
        %v539 = vld [vmem:[%s3 + $0x8] sm:$0xf]
        %v540 = vld [vmem:[%s3 + $0xc] sm:$0xf]
        %v541 = vld [vmem:[%s3 + $0x10] sm:$0xf]
        %v542 = vld [vmem:[%s3 + $0x14] sm:$0xf]
        %v543 = vld [vmem:[%s3 + $0x18] sm:$0xf]
        %v544 = vld [vmem:[%s3 + $0x1c] sm:$0xf]
        %v545 = vld [vmem:[%s3 + $0x20] sm:$0xf]
        %v546 = vld [vmem:[%s3 + $0x24] sm:$0xf]
        %v547 = vld [vmem:[%s3 + $0x28] sm:$0xf]
        %v548 = vld [vmem:[%s3 + $0x2c] sm:$0xf]
        %v549 = vld [vmem:[%s3 + $0x30] sm:$0xf]
        %v550 = vld [vmem:[%s3 + $0x34] sm:$0xf]
        %v551 = vld [vmem:[%s3 + $0x38] sm:$0xf]
        %v552 = vld [vmem:[%s3 + $0x3c] sm:$0xf]
        %v569 = vunpack.c.l.b16 %v537
        %v570 = vunpack.c.l.b16 %v538
        %v571 = vunpack.c.l.b16 %v539
        %v572 = vunpack.c.l.b16 %v540
        %v573 = vunpack.c.l.b16 %v541
        %v574 = vunpack.c.l.b16 %v542
        %v575 = vunpack.c.l.b16 %v543
        %v576 = vunpack.c.l.b16 %v544
        %v577 = vunpack.c.l.b16 %v545
        %v578 = vunpack.c.l.b16 %v546
        %v579 = vunpack.c.l.b16 %v547
        %v580 = vunpack.c.l.b16 %v548
        %v581 = vunpack.c.l.b16 %v549
        %v582 = vunpack.c.l.b16 %v550
        %v583 = vunpack.c.l.b16 %v551
        %v584 = vunpack.c.l.b16 %v552
        %v585 = vpack.c.b16 %v570, %v569
        %v586 = vpack.c.b16 %v572, %v571
        %v587 = vpack.c.b16 %v574, %v573
        %v588 = vpack.c.b16 %v576, %v575
        %v589 = vpack.c.b16 %v578, %v577
        %v590 = vpack.c.b16 %v580, %v579
        %v591 = vpack.c.b16 %v582, %v581
        %v592 = vpack.c.b16 %v584, %v583
        %601 = vmatprep.subr.bf16.mxu0 0
        %602 = vmatpush1.bf16.msra.mxu0 %v592
        %603 = vmatprep.subr.bf16.mxu0 0
        %604 = vmatpush1.bf16.msra.mxu0 %v591
        %605 = vmatprep.subr.bf16.mxu0 0
        %606 = vmatpush1.bf16.msra.mxu0 %v590
        %607 = vmatprep.subr.bf16.mxu0 0
        %608 = vmatpush1.bf16.msra.mxu0 %v589
        %609 = vmatprep.subr.bf16.mxu0 0
        %610 = vmatpush1.bf16.msra.mxu0 %v588
        %611 = vmatprep.subr.bf16.mxu0 0
        %612 = vmatpush1.bf16.msra.mxu0 %v587
        %613 = vmatprep.subr.bf16.mxu0 0
        %614 = vmatpush1.bf16.msra.mxu0 %v586
        %615 = vmatprep.subr.bf16.mxu0 0
        %616 = vmatpush1.bf16.msra.mxu0 %v585
        %617 = vmatprep.subr.bf16.mxu0 0
        %618 = vmatpush2.bf16.msra.mxu0 0
        %619 = vmatprep.subr.bf16.mxu0 0
        %620 = vmatpush2.bf16.msra.mxu0 0
        %621 = vmatprep.subr.bf16.mxu0 0
        %622 = vmatpush2.bf16.msra.mxu0 0
        %623 = vmatprep.subr.bf16.mxu0 0
        %624 = vmatpush2.bf16.msra.mxu0 0
        %625 = vmatprep.subr.bf16.mxu0 0
        %626 = vmatpush2.bf16.msra.mxu0 0
        %627 = vmatprep.subr.bf16.mxu0 0
        %628 = vmatpush2.bf16.msra.mxu0 0
        %629 = vmatprep.subr.bf16.mxu0 0
        %630 = vmatpush2.bf16.msra.mxu0 0
        %631 = vmatprep.subr.bf16.mxu0 0
        %632 = vmatpush2.bf16.msra.mxu0 0
        %633 = vmatprep.mubr.bf16.mxu0 0
        %634 = vmatmul.mubr.bf16.gmra.mxu0 %v529
        %v635 = vpop.f32.mrf.mxu0
        %v636 = vadd.f32 0.0, %v635
        %v637 = vpop.f32.mrf.mxu0
        %v638 = vpop.f32.mrf.mxu0
        %v639 = vadd.f32 0.0, %v638
        %v640 = vpop.f32.mrf.mxu0
        %641 = vmatprep.mubr.bf16.mxu0 0
        %642 = vmatmul.mubr.bf16.gmra.mxu0 %v530
        %v643 = vpop.f32.mrf.mxu0
        %v644 = vadd.f32 0.0, %v643
        %v645 = vpop.f32.mrf.mxu0
        %v646 = vpop.f32.mrf.mxu0
        %v647 = vadd.f32 0.0, %v646
        %v648 = vpop.f32.mrf.mxu0
        %649 = vmatprep.mubr.bf16.mxu0 0
        %650 = vmatmul.mubr.bf16.gmra.mxu0 %v531
        %v651 = vpop.f32.mrf.mxu0
        %v652 = vadd.f32 0.0, %v651
        %v653 = vpop.f32.mrf.mxu0
        %v654 = vpop.f32.mrf.mxu0
        %v655 = vadd.f32 0.0, %v654
        %v656 = vpop.f32.mrf.mxu0
        %657 = vmatprep.mubr.bf16.mxu0 0
        %658 = vmatmul.mubr.bf16.gmra.mxu0 %v532
        %v659 = vpop.f32.mrf.mxu0
        %v660 = vadd.f32 0.0, %v659
        %v661 = vpop.f32.mrf.mxu0
        %v662 = vpop.f32.mrf.mxu0
        %v663 = vadd.f32 0.0, %v662
        %v664 = vpop.f32.mrf.mxu0
        %665 = vmatprep.mubr.bf16.mxu0 0
        %666 = vmatmul.mubr.bf16.gmra.mxu0 %v533
        %v667 = vpop.f32.mrf.mxu0
        %v668 = vadd.f32 0.0, %v667
        %v669 = vpop.f32.mrf.mxu0
        %v670 = vpop.f32.mrf.mxu0
        %v671 = vadd.f32 0.0, %v670
        %v672 = vpop.f32.mrf.mxu0
        %673 = vmatprep.mubr.bf16.mxu0 0
        %674 = vmatmul.mubr.bf16.gmra.mxu0 %v534
        %v675 = vpop.f32.mrf.mxu0
        %v676 = vadd.f32 0.0, %v675
        %v677 = vpop.f32.mrf.mxu0
        %v678 = vpop.f32.mrf.mxu0
        %v679 = vadd.f32 0.0, %v678
        %v680 = vpop.f32.mrf.mxu0
        %681 = vmatprep.mubr.bf16.mxu0 0
        %682 = vmatmul.mubr.bf16.gmra.mxu0 %v535
        %v683 = vpop.f32.mrf.mxu0
        %v684 = vadd.f32 0.0, %v683
        %v685 = vpop.f32.mrf.mxu0
        %v686 = vpop.f32.mrf.mxu0
        %v687 = vadd.f32 0.0, %v686
        %v688 = vpop.f32.mrf.mxu0
        %689 = vmatprep.mubr.bf16.mxu0 0
        %690 = vmatmul.mubr.bf16.gmra.mxu0 %v536
        %v691 = vpop.f32.mrf.mxu0
        %v692 = vadd.f32 0.0, %v691
        %v693 = vpop.f32.mrf.mxu0
        %v694 = vpop.f32.mrf.mxu0
        %v695 = vadd.f32 0.0, %v694
        %v696 = vpop.f32.mrf.mxu0
        %697 = vdwg.mxu0
        %v698 = vpack.c.bf16 %v639, %v636
        %v699 = vpack.c.bf16 %v647, %v644
        %v700 = vpack.c.bf16 %v655, %v652
        %v701 = vpack.c.bf16 %v663, %v660
        %v702 = vpack.c.bf16 %v671, %v668
        %v703 = vpack.c.bf16 %v679, %v676
        %v704 = vpack.c.bf16 %v687, %v684
        %v705 = vpack.c.bf16 %v695, %v692
        %v706 = vld [vmem:[%s4] sm:$0x1]
        %v708 = vpack.i.b16 %v706, %v706
        %v710 = vlaneseq
        %v711 = vshrl.u32 %v710, 7
        %v712 = vsub.s32 0, %v711
        %v713 = vrot.slane %v708, %v712
        %v714 = vadd.bf16 %v698, %v713
        %v715 = vadd.bf16 %v699, %v713
        %v716 = vadd.bf16 %v700, %v713
        %v717 = vadd.bf16 %v701, %v713
        %v718 = vadd.bf16 %v702, %v713
        %v719 = vadd.bf16 %v703, %v713
        %v720 = vadd.bf16 %v704, %v713
        %v721 = vadd.bf16 %v705, %v713
        %v722 = vmax.bf16 %v714, 0
        %v723 = vmax.bf16 %v715, 0
        %v724 = vmax.bf16 %v716, 0
        %v725 = vmax.bf16 %v717, 0
        %v726 = vmax.bf16 %v718, 0
        %v727 = vmax.bf16 %v719, 0
        %v728 = vmax.bf16 %v720, 0
        %v729 = vmax.bf16 %v721, 0
        %v730 = vld [vmem:[%s5] sm:$0xf]
        %v731 = vld [vmem:[%s5 + $0x4] sm:$0xf]
        %v732 = vld [vmem:[%s5 + $0x8] sm:$0xf]
        %v733 = vld [vmem:[%s5 + $0xc] sm:$0xf]
        %v734 = vld [vmem:[%s5 + $0x10] sm:$0xf]
        %v735 = vld [vmem:[%s5 + $0x14] sm:$0xf]
        %v736 = vld [vmem:[%s5 + $0x18] sm:$0xf]
        %v737 = vld [vmem:[%s5 + $0x1c] sm:$0xf]
        %v738 = vld [vmem:[%s5 + $0x20] sm:$0xf]
        %v739 = vld [vmem:[%s5 + $0x24] sm:$0xf]
        %v740 = vld [vmem:[%s5 + $0x28] sm:$0xf]
        %v741 = vld [vmem:[%s5 + $0x2c] sm:$0xf]
        %v742 = vld [vmem:[%s5 + $0x30] sm:$0xf]
        %v743 = vld [vmem:[%s5 + $0x34] sm:$0xf]
        %v744 = vld [vmem:[%s5 + $0x38] sm:$0xf]
        %v745 = vld [vmem:[%s5 + $0x3c] sm:$0xf]
        %v762 = vunpack.c.l.b16 %v730
        %v763 = vunpack.c.l.b16 %v731
        %v764 = vunpack.c.l.b16 %v732
        %v765 = vunpack.c.l.b16 %v733
        %v766 = vunpack.c.l.b16 %v734
        %v767 = vunpack.c.l.b16 %v735
        %v768 = vunpack.c.l.b16 %v736
        %v769 = vunpack.c.l.b16 %v737
        %v770 = vunpack.c.l.b16 %v738
        %v771 = vunpack.c.l.b16 %v739
        %v772 = vunpack.c.l.b16 %v740
        %v773 = vunpack.c.l.b16 %v741
        %v774 = vunpack.c.l.b16 %v742
        %v775 = vunpack.c.l.b16 %v743
        %v776 = vunpack.c.l.b16 %v744
        %v777 = vunpack.c.l.b16 %v745
        %v778 = vpack.c.b16 %v763, %v762
        %v779 = vpack.c.b16 %v765, %v764
        %v780 = vpack.c.b16 %v767, %v766
        %v781 = vpack.c.b16 %v769, %v768
        %v782 = vpack.c.b16 %v771, %v770
        %v783 = vpack.c.b16 %v773, %v772
        %v784 = vpack.c.b16 %v775, %v774
        %v785 = vpack.c.b16 %v777, %v776
        %794 = vmatprep.subr.bf16.mxu0 0
        %795 = vmatpush1.bf16.msra.mxu0 %v785
        %796 = vmatprep.subr.bf16.mxu0 0
        %797 = vmatpush1.bf16.msra.mxu0 %v784
        %798 = vmatprep.subr.bf16.mxu0 0
        %799 = vmatpush1.bf16.msra.mxu0 %v783
        %800 = vmatprep.subr.bf16.mxu0 0
        %801 = vmatpush1.bf16.msra.mxu0 %v782
        %802 = vmatprep.subr.bf16.mxu0 0
        %803 = vmatpush1.bf16.msra.mxu0 %v781
        %804 = vmatprep.subr.bf16.mxu0 0
        %805 = vmatpush1.bf16.msra.mxu0 %v780
        %806 = vmatprep.subr.bf16.mxu0 0
        %807 = vmatpush1.bf16.msra.mxu0 %v779
        %808 = vmatprep.subr.bf16.mxu0 0
        %809 = vmatpush1.bf16.msra.mxu0 %v778
        %810 = vmatprep.subr.bf16.mxu0 0
        %811 = vmatpush2.bf16.msra.mxu0 0
        %812 = vmatprep.subr.bf16.mxu0 0
        %813 = vmatpush2.bf16.msra.mxu0 0
        %814 = vmatprep.subr.bf16.mxu0 0
        %815 = vmatpush2.bf16.msra.mxu0 0
        %816 = vmatprep.subr.bf16.mxu0 0
        %817 = vmatpush2.bf16.msra.mxu0 0
        %818 = vmatprep.subr.bf16.mxu0 0
        %819 = vmatpush2.bf16.msra.mxu0 0
        %820 = vmatprep.subr.bf16.mxu0 0
        %821 = vmatpush2.bf16.msra.mxu0 0
        %822 = vmatprep.subr.bf16.mxu0 0
        %823 = vmatpush2.bf16.msra.mxu0 0
        %824 = vmatprep.subr.bf16.mxu0 0
        %825 = vmatpush2.bf16.msra.mxu0 0
        %826 = vmatprep.mubr.bf16.mxu0 0
        %827 = vmatmul.mubr.bf16.gmra.mxu0 %v722
        %v828 = vpop.f32.mrf.mxu0
        %v829 = vadd.f32 0.0, %v828
        %v830 = vpop.f32.mrf.mxu0
        %v831 = vpop.f32.mrf.mxu0
        %v832 = vadd.f32 0.0, %v831
        %v833 = vpop.f32.mrf.mxu0
        %834 = vmatprep.mubr.bf16.mxu0 0
        %835 = vmatmul.mubr.bf16.gmra.mxu0 %v723
        %v836 = vpop.f32.mrf.mxu0
        %v837 = vadd.f32 0.0, %v836
        %v838 = vpop.f32.mrf.mxu0
        %v839 = vpop.f32.mrf.mxu0
        %v840 = vadd.f32 0.0, %v839
        %v841 = vpop.f32.mrf.mxu0
        %842 = vmatprep.mubr.bf16.mxu0 0
        %843 = vmatmul.mubr.bf16.gmra.mxu0 %v724
        %v844 = vpop.f32.mrf.mxu0
        %v845 = vadd.f32 0.0, %v844
        %v846 = vpop.f32.mrf.mxu0
        %v847 = vpop.f32.mrf.mxu0
        %v848 = vadd.f32 0.0, %v847
        %v849 = vpop.f32.mrf.mxu0
        %850 = vmatprep.mubr.bf16.mxu0 0
        %851 = vmatmul.mubr.bf16.gmra.mxu0 %v725
        %v852 = vpop.f32.mrf.mxu0
        %v853 = vadd.f32 0.0, %v852
        %v854 = vpop.f32.mrf.mxu0
        %v855 = vpop.f32.mrf.mxu0
        %v856 = vadd.f32 0.0, %v855
        %v857 = vpop.f32.mrf.mxu0
        %858 = vmatprep.mubr.bf16.mxu0 0
        %859 = vmatmul.mubr.bf16.gmra.mxu0 %v726
        %v860 = vpop.f32.mrf.mxu0
        %v861 = vadd.f32 0.0, %v860
        %v862 = vpop.f32.mrf.mxu0
        %v863 = vpop.f32.mrf.mxu0
        %v864 = vadd.f32 0.0, %v863
        %v865 = vpop.f32.mrf.mxu0
        %866 = vmatprep.mubr.bf16.mxu0 0
        %867 = vmatmul.mubr.bf16.gmra.mxu0 %v727
        %v868 = vpop.f32.mrf.mxu0
        %v869 = vadd.f32 0.0, %v868
        %v870 = vpop.f32.mrf.mxu0
        %v871 = vpop.f32.mrf.mxu0
        %v872 = vadd.f32 0.0, %v871
        %v873 = vpop.f32.mrf.mxu0
        %874 = vmatprep.mubr.bf16.mxu0 0
        %875 = vmatmul.mubr.bf16.gmra.mxu0 %v728
        %v876 = vpop.f32.mrf.mxu0
        %v877 = vadd.f32 0.0, %v876
        %v878 = vpop.f32.mrf.mxu0
        %v879 = vpop.f32.mrf.mxu0
        %v880 = vadd.f32 0.0, %v879
        %v881 = vpop.f32.mrf.mxu0
        %882 = vmatprep.mubr.bf16.mxu0 0
        %883 = vmatmul.mubr.bf16.gmra.mxu0 %v729
        %v884 = vpop.f32.mrf.mxu0
        %v885 = vadd.f32 0.0, %v884
        %v886 = vpop.f32.mrf.mxu0
        %v887 = vpop.f32.mrf.mxu0
        %v888 = vadd.f32 0.0, %v887
        %v889 = vpop.f32.mrf.mxu0
        %890 = vdwg.mxu0
        %v891 = vpack.c.bf16 %v832, %v829
        %v892 = vpack.c.bf16 %v840, %v837
        %v893 = vpack.c.bf16 %v848, %v845
        %v894 = vpack.c.bf16 %v856, %v853
        %v895 = vpack.c.bf16 %v864, %v861
        %v896 = vpack.c.bf16 %v872, %v869
        %v897 = vpack.c.bf16 %v880, %v877
        %v898 = vpack.c.bf16 %v888, %v885
        %v899 = vld [vmem:[%s6] sm:$0x1]
        %v901 = vpack.i.b16 %v899, %v899
        %v903 = vlaneseq
        %v904 = vshrl.u32 %v903, 7
        %v905 = vsub.s32 0, %v904
        %v906 = vrot.slane %v901, %v905
        %v907 = vadd.bf16 %v891, %v906
        %v908 = vadd.bf16 %v892, %v906
        %v909 = vadd.bf16 %v893, %v906
        %v910 = vadd.bf16 %v894, %v906
        %v911 = vadd.bf16 %v895, %v906
        %v912 = vadd.bf16 %v896, %v906
        %v913 = vadd.bf16 %v897, %v906
        %v914 = vadd.bf16 %v898, %v906
        %v915 = vmax.bf16 %v907, 0
        %v916 = vmax.bf16 %v908, 0
        %v917 = vmax.bf16 %v909, 0
        %v918 = vmax.bf16 %v910, 0
        %v919 = vmax.bf16 %v911, 0
        %v920 = vmax.bf16 %v912, 0
        %v921 = vmax.bf16 %v913, 0
        %v922 = vmax.bf16 %v914, 0
        %v923 = vld [vmem:[%s7] sm:$0xf]
        %924 = vmatprep.subr.bf16.mxu0 0
        %925 = vmatpush1.bf16.xpose.msra.mxu0 %v922
        %926 = vmatprep.subr.bf16.mxu0 0
        %927 = vmatpush1.bf16.xpose.msra.mxu0 %v921
        %928 = vmatprep.subr.bf16.mxu0 0
        %929 = vmatpush1.bf16.xpose.msra.mxu0 %v920
        %930 = vmatprep.subr.bf16.mxu0 0
        %931 = vmatpush1.bf16.xpose.msra.mxu0 %v919
        %932 = vmatprep.subr.bf16.mxu0 0
        %933 = vmatpush1.bf16.xpose.msra.mxu0 %v918
        %934 = vmatprep.subr.bf16.mxu0 0
        %935 = vmatpush1.bf16.xpose.msra.mxu0 %v917
        %936 = vmatprep.subr.bf16.mxu0 0
        %937 = vmatpush1.bf16.xpose.msra.mxu0 %v916
        %938 = vmatprep.subr.bf16.mxu0 0
        %939 = vmatpush1.bf16.xpose.msra.mxu0 %v915
        %940 = vmatprep.subr.bf16.mxu0 0
        %941 = vmatpush2.bf16.xpose.msra.mxu0 0
        %942 = vmatprep.subr.bf16.mxu0 0
        %943 = vmatpush2.bf16.xpose.msra.mxu0 0
        %944 = vmatprep.subr.bf16.mxu0 0
        %945 = vmatpush2.bf16.xpose.msra.mxu0 0
        %946 = vmatprep.subr.bf16.mxu0 0
        %947 = vmatpush2.bf16.xpose.msra.mxu0 0
        %948 = vmatprep.subr.bf16.mxu0 0
        %949 = vmatpush2.bf16.xpose.msra.mxu0 0
        %950 = vmatprep.subr.bf16.mxu0 0
        %951 = vmatpush2.bf16.xpose.msra.mxu0 0
        %952 = vmatprep.subr.bf16.mxu0 0
        %953 = vmatpush2.bf16.xpose.msra.mxu0 0
        %954 = vmatprep.subr.bf16.mxu0 0
        %955 = vmatpush2.bf16.xpose.msra.mxu0 0
        %956 = vmatprep.mubr.bf16.mxu0 0
        %957 = vmatmul.mubr.bf16.gmra.mxu0 %v923
        %v958 = vpop.f32.mrf.mxu0
        %v959 = vadd.f32 0.0, %v958
        %v960 = vpop.f32.mrf.mxu0
        %v961 = vpop.f32.mrf.mxu0
        %v962 = vpop.f32.mrf.mxu0
        %963 = vdwg.mxu0
        %v964 = vld [vmem:[#allocation2] sm:$0x1]
        %966 = vset.pattern.permute.xlu0 0
        %967 = vperm.xlu0 %966, %v964
        %v968 = vpop.permute.xlu0 %967
        %v970 = vlaneseq
        %v971 = vshrl.u32 %v970, 7
        %v972 = vsub.s32 0, %v971
        %v973 = vrot.slane %v968, %v972
        %v974 = vadd.f32 %v959, %v973
        %v975 = vxor.u32 %v974, 2147483648
        %v976 = vmul.f32 %v975, 1.442695
        %v977 = vpow.pop %v976
        %v978 = vadd.f32 %v977, 1.0
        %v979 = vrcp.pop %v978
        %v980 = vmul.f32 1.0, %v979
        %981 = vst [vmem:[%s327] sm:$0x1] %v980
        %s982 = sand.u32 %s227, 1
        %s983 = scalar_lea.sflag [#allocation4], %s982
        %s984 = sand.u32 %s227, 1
        %s985 = scalar_lea.vmem [#allocation3], %s984
        // Predicated region
        $region57: #{_net_forward.1} parent=55 // pred_check
          %p986 = pneg %p237
        $region58: #{_net_forward.1} parent=55 // pred_check_branch
          %988 = sbr.rel (%p986) target = $region60
        $region59: #{_net_forward.1} parent=55 // pred_region
          %s990 = ssub.s32 16, 16
          %991 = vsyncadd %s983, %s990
          %s992 = smul.addr %s25, 16
          %s993 = scalar_lea.hbm %s9, %s992
          %s995 = sshll.u32 %s985, 4
          %s996 = int_to_ptr.vmem [resolvable:$true] %s995
          %998 = dma.vmem_to_hbm [thread:$0]  %s996, 16, %s993, %s983
        $region60: #{_net_forward.1} parent=55 // pred_fallthru
          _
      $region56: #{_net_forward.1} parent=5 // pred_fallthru
        _
      %p999 = scmp.le.s32.totalorder 2, %s20
      // Predicated region
      $region61: #{_net_forward.1} parent=5 // pred_check
        %p1000 = pneg %p999
      $region62: #{_net_forward.1} parent=5 // pred_check_branch
        %1002 = sbr.rel (%p1000) target = $region64
      $region63: #{_net_forward.1} parent=5 // pred_region
        %s1003 = ssub.s32 %s20, 2
        // Predicated region
        $region65: #{_net_forward.1} parent=63 // pred_check
          %p1004 = pneg %p243
        $region66: #{_net_forward.1} parent=63 // pred_check_branch
          %1006 = sbr.rel (%p1004) target = $region68
        $region67: #{_net_forward.1} parent=63 // pred_region
          %s1007 = sand.u32 %s228, 1
          %s1008 = scalar_lea.sflag [#allocation4], %s1007
          %s1009 = sand.u32 %s228, 1
          %s1010 = scalar_lea.vmem [#allocation3], %s1009
          %1011 = dma.done %s1008, 16
        $region68: #{_net_forward.1} parent=63 // pred_fallthru
          _
      $region64: #{_net_forward.1} parent=5 // pred_fallthru
        _
    $region6: #{_net_forward.1} parent=1 // loop_footer
      %s24 = sadd.s32 1, %s20
    $region7: #{_net_forward.1} parent=1 // loop_footer_branch
      %19 = sbr.rel target = $region3
    $region8: #{_net_forward.1} parent=1 // loop_exit
      _
    %1012 = vsyncpa [#allocation4], 1
    %s1013 = scalar_lea.sflag [#allocation4], 1
    %1014 = vsyncpa %s1013, 1

</llo_original>
